<compile_context>
chip_gen: v7x
topology: tpu7x:2x2x1
jax: 0.10.0
libtpu: 0.0.40
codegen_flags: <defaults>
</compile_context>

<pallas_src>
import math
from functools import partial

import jax
import jax.numpy as jnp
from jax.experimental import pallas as pl
from jax.experimental.pallas import tpu as pltpu


_NBUF = 32  # row-DMA semaphore-ring depth (power of two); review: 8 -> 32


def _embed_vmem_kernel(ids_ref, table_ref, out_ref, *, tt, scale):
    """Fast path: table resident in VMEM as (V, 1, D); pure in-VMEM gather."""
    t0 = pl.program_id(0) * tt  # first flat-token index of this tile

    @pl.loop(0, tt)
    def _(i):
        tok = ids_ref[t0 + i]                     # scalar id read from SMEM
        row = table_ref[tok]                      # (1, D) dynamic VMEM read
        out_ref[pl.ds(i, 1), :] = (
            row.astype(jnp.float32) * scale).astype(out_ref.dtype)


def _embed_hbm_kernel(ids_ref, table_hbm, out_ref, sem, *, tt, scale):
    """Large-vocab path: per-token row DMA HBM -> output block, one scale pass."""
    t0 = pl.program_id(0) * tt

    def start_row(i, slot, tok):
        # DMA the gathered row straight into the output block (no staging).
        pltpu.make_async_copy(
            table_hbm.at[pl.ds(tok, 1), :],
            out_ref.at[pl.ds(i, 1), :],
            sem.at[slot],
        ).start()

    def wait_row(i, slot):
        # Reconstruct a descriptor with the SAME shapes / byte count as the
        # copy started for row `i` (src row index is irrelevant for the wait;
        # only the semaphore and dst size matter).
        pltpu.make_async_copy(
            table_hbm.at[pl.ds(0, 1), :],
            out_ref.at[pl.ds(i, 1), :],
            sem.at[slot],
        ).wait()

    # Prime the ring with up to _NBUF outstanding row fetches, clamped so that
    # every started copy is waited on below even when tt < _NBUF.
    n_prime = min(_NBUF, tt)
    for s in range(n_prime):
        start_row(s, s, ids_ref[t0 + s])

    if tt > _NBUF:
        @pl.loop(0, tt - _NBUF)
        def _(j):
            i = j + _NBUF
            slot = j & (_NBUF - 1)
            tok = ids_ref[t0 + i]      # read refill id BEFORE the wait
            wait_row(j, slot)          # row j complete -> slot free
            start_row(i, slot, tok)

    # Drain the last n_prime in-flight rows.
    for s in range(n_prime):
        row = tt - n_prime + s
        wait_row(row, row & (_NBUF - 1))

    # Single dense scale pass over the whole lane-dense (tt, D) tile.
    out_ref[...] = (out_ref[...].astype(jnp.float32) * scale).astype(out_ref.dtype)


def embeddings_forward(ids, table, d_model=None, *, tile_tokens=256,
                       table_vmem_budget_bytes=32 * 1024 * 1024):
    """Pallas equivalent of Embeddings.forward: table[ids] * sqrt(d_model)."""
    B, S = ids.shape
    V, D = table.shape
    if d_model is None:
        d_model = D
    assert D == d_model
    scale = float(math.sqrt(d_model))

    # Flatten (B, S) -> one token axis; ids live in SMEM via scalar prefetch.
    N = B * S
    ids_flat = ids.reshape(N).astype(jnp.int32)

    # Round token count up to a sublane multiple and pick the per-step tile.
    n_pad = -(-N // 8) * 8
    tt = min(tile_tokens, n_pad)
    tt = max(8, (tt // 8) * 8)
    n_pad = -(-n_pad // tt) * tt
    if n_pad != N:
        ids_flat = jnp.pad(ids_flat, (0, n_pad - N))  # pad with valid id 0

    grid = (n_pad // tt,)
    dtype_bytes = jnp.dtype(table.dtype).itemsize
    lanes = -(-D // 128) * 128
    # Conservative resident-table footprint: (1, D) rows pad to 8 sublanes.
    table_vmem_bytes = V * 8 * lanes * dtype_bytes
    out_block_bytes = 2 * tt * lanes * dtype_bytes  # double-buffered output

    use_vmem_table = table_vmem_bytes <= table_vmem_budget_bytes

    if use_vmem_table:
        kernel = partial(_embed_vmem_kernel, tt=tt, scale=scale)
        table_arg = table.reshape(V, 1, D)
        in_specs = [pl.BlockSpec((V, 1, D), lambda i, ids: (0, 0, 0))]
        scratch_shapes = []
        vmem_needed = table_vmem_bytes + out_block_bytes + (2 << 20)
    else:
        kernel = partial(_embed_hbm_kernel, tt=tt, scale=scale)
        table_arg = table
        in_specs = [pl.BlockSpec(memory_space=pl.ANY)]  # table stays in HBM
        scratch_shapes = [pltpu.SemaphoreType.DMA((_NBUF,))]
        vmem_needed = out_block_bytes + (2 << 20)

    # Explicit scoped-VMEM request; cap at 48 MiB (safe on v5e/v6e/v7x).
    vmem_limit = int(min(max(vmem_needed, 16 << 20), 48 << 20))

    out_flat = pl.pallas_call(
        kernel,
        out_shape=jax.ShapeDtypeStruct((n_pad, D), table.dtype),
        grid_spec=pltpu.PrefetchScalarGridSpec(
            num_scalar_prefetch=1,                         # ids -> SMEM
            grid=grid,
            in_specs=in_specs,
            out_specs=pl.BlockSpec((tt, D), lambda i, ids: (i, 0)),
            scratch_shapes=scratch_shapes,
        ),
        compiler_params=pltpu.CompilerParams(
            dimension_semantics=("parallel",),             # independent tiles
            vmem_limit_bytes=vmem_limit,
        ),
    )(ids_flat, table_arg)

    return out_flat[:N].reshape(B, S, D)


if __name__ == "__main__":
    # Deterministic synthetic parameters / inputs (no checkpoint loading).
    batch, seq_len, d_model, vocab = 2, 8, 128, 512

    key = jax.random.PRNGKey(0)
    k_table, k_ids = jax.random.split(key)

    # nn.Embedding weight: (vocab, d_model)
    table = jax.random.normal(k_table, (vocab, d_model), dtype=jnp.float32) * 0.02
    ids = jax.random.randint(k_ids, (batch, seq_len), 0, vocab, dtype=jnp.int32)

    ref = table[ids] * math.sqrt(d_model)

    # Fast path: table fits the VMEM budget -> resident-table in-VMEM gather.
    out_fast = jax.block_until_ready(embeddings_forward(ids, table, d_model))
    assert out_fast.shape == (batch, seq_len, d_model)
    assert out_fast.dtype == jnp.float32
    assert jnp.allclose(out_fast, ref, atol=1e-5, rtol=1e-5)

    # Large-vocab path: force the HBM row-DMA gather by zeroing the budget.
    out_hbm = jax.block_until_ready(
        embeddings_forward(ids, table, d_model, table_vmem_budget_bytes=0))
    assert jnp.allclose(out_hbm, ref, atol=1e-5, rtol=1e-5)

    print("KERNEL_OK")
</pallas_src>

<mosaic_0001>
module attributes {stable_mosaic.version = 11 : i64} {
  func.func @_embed_vmem_kernel(%arg0: i32, %arg1: memref<16xi32, #tpu.memory_space<smem>>, %arg2: memref<512x1x128xf32, #tpu.memory_space<vmem>>, %arg3: memref<16x128xf32, #tpu.memory_space<vmem>>) attributes {dimension_semantics = [#tpu.dimension_semantics<parallel>], iteration_bounds = array<i64: 1>, scalar_prefetch = 1 : i64, scratch_operands = 0 : i64, tpu.core_type = #tpu.core_type<tc>, window_params = [{pipeline_mode = #tpu.pipeline_mode<synchronous>, transform_indices = @transform_0, window_bounds = array<i64: 512, 1, 128>}, {transform_indices = @transform_1, window_bounds = array<i64: 16, 128>}]} {
    %c16_i32 = arith.constant 16 : i32
    %0 = arith.muli %arg0, %c16_i32 : i32
    %c0_i32 = arith.constant 0 : i32
    %c16_i32_0 = arith.constant 16 : i32
    %1 = arith.addi %c0_i32, %c16_i32_0 : i32
    %c1_i32 = arith.constant 1 : i32
    scf.for %arg4 = %c0_i32 to %1 step %c1_i32  : i32 {
      %c1_i32_2 = arith.constant 1 : i32
      %2 = arith.muli %arg4, %c1_i32_2 : i32
      %c0_i32_3 = arith.constant 0 : i32
      %3 = arith.addi %c0_i32_3, %2 : i32
      %4 = arith.addi %0, %3 : i32
      %5 = arith.index_cast %4 : i32 to index
      %6 = memref.load %arg1[%5] : memref<16xi32, #tpu.memory_space<smem>>
      %7 = arith.index_cast %6 : i32 to index
      %c0 = arith.constant 0 : index
      %c0_4 = arith.constant 0 : index
      %8 = vector.load %arg2[%7, %c0, %c0_4] : memref<512x1x128xf32, #tpu.memory_space<vmem>>, vector<1x1x128xf32>
      %9 = vector.shape_cast %8 : vector<1x1x128xf32> to vector<1x128xf32>
      %cst = arith.constant 11.3137083 : f32
      %10 = vector.broadcast %cst : f32 to vector<1x128xf32>
      %11 = arith.mulf %9, %10 : vector<1x128xf32>
      %12 = arith.index_cast %3 : i32 to index
      %c0_5 = arith.constant 0 : index
      %13 = vector.load %arg3[%12, %c0_5] : memref<16x128xf32, #tpu.memory_space<vmem>>, vector<1x128xf32>
      tpu.vector_store %arg3[%12, %c0_5], %11 {strides = array<i32>} : memref<16x128xf32, #tpu.memory_space<vmem>>, vector<1x128xf32>,
    }
    %c16_i32_1 = arith.constant 16 : i32
    return
  }
  func.func @transform_0(%arg0: i32, %arg1: memref<16xi32, #tpu.memory_space<smem>>) -> (i32, i32, i32) {
    %c0_i32 = arith.constant 0 : i32
    %c0_i32_0 = arith.constant 0 : i32
    %c0_i32_1 = arith.constant 0 : i32
    %c0_i32_2 = arith.constant 0 : i32
    return %c0_i32, %c0_i32_0, %c0_i32_1 : i32, i32, i32
  }
  func.func @transform_1(%arg0: i32, %arg1: memref<16xi32, #tpu.memory_space<smem>>) -> (i32, i32) {
    %c0_i32 = arith.constant 0 : i32
    %c0_i32_0 = arith.constant 0 : i32
    return %arg0, %c0_i32 : i32, i32
  }
}

</mosaic_0001>

<llo_original>
// kernel: tpu_custom_call.1
$region0: #{tpu_custom_call.1}
  #allocation0 [shape = 'u32[]', space=smem, size = 0x4, offset = 0x4, fixed_abs, tag = 'smem constant byte address 0x4 - core index']
  #allocation1 [shape = 'u32[144,128]{1,0:T(1,128)}', space=vmem, size = 0x12000, scoped, tag = 'internal scratch']
  #allocation2 [shape = 's32[1]{0}', space=sflag, size = 0x4, scoped, tag = 'scoped memory for tpu_custom_call.1']
  #allocation3 [shape = 'u8[512]{0}', space=smem, size = 0x200, scoped, tag = 'prefetched SMEM operand 0']
  %s0 = inlined_call_operand.hbm [shape: s32[16], index: 0, kind: input, shape index: {}]
  %s1 = inlined_call_operand.hbm [shape: f32[512,1,128], index: 1, kind: input, shape index: {}]
  %s2 = inlined_call_operand.hbm [shape: f32[16,128], index: 2, kind: output, shape index: {}]
  %s3 = sld [smem:[#allocation0]]
  $region25: #{tpu_custom_call.1} parent=0
    _
  %s5 = ssub.s32 1, %s3
  %s6 = scalar_select 0, %s5, %s3
  %8 = dma.hbm_to_smem %s0, 16, [#allocation3], [#allocation2]
  %9 = dma.done [#allocation2], 16
  %10 = sfence
  $region1: #{tpu_custom_call.1} parent=0
    #allocation4 [shape = 'u8[262144]{0}', space=vmem, size = 0x40000, scoped, tag = 'input window, operand 1, single buffered']
    #allocation5 [shape = 's32[1]{0}', space=sflag, size = 0x4, scoped, tag = 'scoped memory for tpu_custom_call.1']
    #allocation6 [shape = 's32[1]{0}', space=sflag, size = 0x4, scoped, tag = 'scoped memory for tpu_custom_call.1']
    #allocation7 [shape = 'u8[8192]{0}', space=vmem, size = 0x2000, scoped, tag = 'output window, operand 0, single buffered']
    %11 = vsyncpa [#allocation5], 0
    %12 = vsyncpa [#allocation6], 0
    // Predicated region
    $region2: #{tpu_custom_call.1} parent=1 // pred_check
      _
    $region3: #{tpu_custom_call.1} parent=1 // pred_check_branch
      %14 = sbr.rel (0) target = $region5
    $region4: #{tpu_custom_call.1} parent=1 // pred_region
      %s16 = ssub.s32 8192, 8192
      %17 = vsyncadd [#allocation5], %s16
      %s18 = sshll.u32 [#allocation4], 4
      %s19 = int_to_ptr.vmem [resolvable:$true] %s18
      %24 = dma.hbm_to_vmem [thread:$0]  %s1, 8192, %s19, [#allocation5], 16, 16, 1
    $region5: #{tpu_custom_call.1} parent=1 // pred_fallthru
      _
    // Predicated region
    $region6: #{tpu_custom_call.1} parent=1 // pred_check
      _
    $region7: #{tpu_custom_call.1} parent=1 // pred_check_branch
      %26 = sbr.rel (0) target = $region9
    $region8: #{tpu_custom_call.1} parent=1 // pred_region
      %27 = dma.done [#allocation5], 8192
    $region9: #{tpu_custom_call.1} parent=1 // pred_fallthru
      _
    %s28 = smul.u32 0, 16
    loop: start=0, step=1, limit=16
    $region10: #{tpu_custom_call.1} parent=1 // loop_pre_header
      _
    $region11: #{tpu_custom_call.1} parent=1 // loop_header
      %s30 = sphi 0, %s34
      %p31 = scmp.ge.s32.totalorder %s30, 16
    $region12: #{tpu_custom_call.1} parent=1 // loop_header_branch
      %33 = sbr.rel (%p31) target = $region16
    $region13: #{tpu_custom_call.1} parent=1 // loop_body
      %s35 = sadd.s32 %s28, %s30
      %s36 = sld [smem:[#allocation3 + %s35]]
      %s37 = scalar_lea.vmem [#allocation4], %s36
      %v38 = vld [vmem:[%s37] sm:$0x1]
      %v39 = vmul.f32 %v38, 11.313708
      %s40 = scalar_lea.vmem [#allocation7], %s30
      %41 = vst [vmem:[%s40] sm:$0x1] %v39
    $region14: #{tpu_custom_call.1} parent=1 // loop_footer
      %s34 = sadd.s32 1, %s30
    $region15: #{tpu_custom_call.1} parent=1 // loop_footer_branch
      %29 = sbr.rel target = $region11
    $region16: #{tpu_custom_call.1} parent=1 // loop_exit
      _
    // Predicated region
    $region17: #{tpu_custom_call.1} parent=1 // pred_check
      _
    $region18: #{tpu_custom_call.1} parent=1 // pred_check_branch
      %43 = sbr.rel (0) target = $region20
    $region19: #{tpu_custom_call.1} parent=1 // pred_region
      %s45 = ssub.s32 256, 256
      %46 = vsyncadd [#allocation6], %s45
      %s47 = sshll.u32 [#allocation7], 4
      %s48 = int_to_ptr.vmem [resolvable:$true] %s47
      %53 = dma.vmem_to_hbm [thread:$0]  %s48, 256, %s2, [#allocation6], 128, 128, 8
    $region20: #{tpu_custom_call.1} parent=1 // pred_fallthru
      _
    // Predicated region
    $region21: #{tpu_custom_call.1} parent=1 // pred_check
      _
    $region22: #{tpu_custom_call.1} parent=1 // pred_check_branch
      %55 = sbr.rel (0) target = $region24
    $region23: #{tpu_custom_call.1} parent=1 // pred_region
      %56 = dma.done [#allocation6], 256
    $region24: #{tpu_custom_call.1} parent=1 // pred_fallthru
      _
    %57 = vsyncpa [#allocation5], 1
    %58 = vsyncpa [#allocation6], 1

</llo_original>
